<compile_context>
chip_gen: v7x
topology: tpu7x:2x2x1
jax: 0.10.0
libtpu: 0.0.40
codegen_flags: <defaults>
</compile_context>

<pallas_src>
import math

import jax
import jax.numpy as jnp
from jax.experimental import pallas as pl
from jax.experimental.pallas import tpu as pltpu


def _cdiv(a, b):
    return -(-a // b)


def _tpu_info():
    """Best-effort hardware query; conservative defaults when unavailable."""
    vmem_bytes = 64 * 1024 * 1024
    n_cores = 1
    try:
        info = pltpu.get_tpu_info()
        for attr in ("vmem_capacity_bytes", "vmem_size_bytes", "vmem_bytes"):
            v = getattr(info, attr, None)
            if isinstance(v, int) and v > 0:
                vmem_bytes = v
                break
        for attr in ("num_tensorcores", "tensorcore_count", "num_cores", "core_count"):
            c = getattr(info, attr, None)
            if isinstance(c, int) and c > 0:
                n_cores = c
                break
    except Exception:
        pass
    return vmem_bytes, n_cores


def masked_batchnorm_train(x, mask, weight, bias, *, eps=1e-5, row_tile=None):
    """MaskedNorm('batch') forward, training mode.

    x:      (B, T, F) float32 or bfloat16
    mask:   (B, T)    any numeric / bool; >0 means "valid"
    weight: (F,)      BatchNorm affine scale
    bias:   (F,)      BatchNorm affine shift
    returns (B, T, F) in x.dtype
    """
    B, T, F = x.shape
    N = B * T
    in_dtype = x.dtype
    itemsize = jnp.dtype(in_dtype).itemsize

    vmem_cap, n_cores = _tpu_info()
    if vmem_cap >= 96 * 1024 * 1024:      # v5e / v6e class (128 MiB physical VMEM)
        vmem_limit = 64 * 1024 * 1024
        budget = 32 * 1024 * 1024
        cap_rows = 2048
    else:                                 # v7x class (64 MiB per TC) or unknown
        vmem_limit = 32 * 1024 * 1024
        budget = 16 * 1024 * 1024
        cap_rows = 1024

    # ---- lane folding: pack G consecutive rows onto the 128-lane axis -------
    if F >= 128:
        G = 1
    else:
        G = 128 // math.gcd(F, 128)       # FL = lcm(F, 128): lane-dense blocks
        while G > 1 and G * F > 1024:     # keep FL (and the fold matrix) small
            G //= 2
        if N % G != 0:
            g2 = math.gcd(G, N)           # a divisor of N avoids any copy of x
            if g2 * F >= 128:
                G = g2
    FL = G * F

    pad_rows = (-N) % G                   # usually 0 -> no extra HBM traversal of x
    Np = N + pad_rows
    # Tiny inputs: pad up to 8 folded rows so one exact block covers everything.
    if Np < 8 * G:
        pad_rows = 8 * G - N
        Np = 8 * G
    R = Np // G                           # folded rows

    # ---- split the stats reduction across TensorCores (multi-TC chips) ------
    num_splits = 2 if n_cores >= 2 else 1

    # ---- row tile: the largest that comfortably fits VMEM -------------------
    if row_tile is None:
        per_row = FL * (4 * itemsize + 16)   # in + out (multi-buffered) + f32 temps
        fit = max(16, (budget // per_row) // 16 * 16)
        row_tile = int(min(cap_rows, fit))
    row_tile = int(row_tile)
    if row_tile >= R:
        row_tile = R                      # single block == full array (always legal)
    else:
        row_tile = max(16, (row_tile // 16) * 16)   # mult. of 16: f32/bf16 tiling safe
        row_tile = min(row_tile, R)
    RT = _cdiv(R, row_tile)               # last tile may be ragged (handled in-kernel)
    if RT % num_splits != 0:
        num_splits = 1                    # avoid fully out-of-bounds tiles
    tiles_per_split = RT // num_splits

    # ---- folded views (free reshapes when pad_rows == 0, the common case) ---
    x2 = x.reshape(N, F)
    if pad_rows:
        x2 = jnp.pad(x2, ((0, pad_rows), (0, 0)))
    xf = x2.reshape(R, FL)                # input dtype kept through the DMA

    # Mask: >0 test, bf16 0/1 (half the HBM bytes of f32), zero-padded so every
    # grid tile reads a defined mask (ragged-tail over-reads of x are then inert).
    m_rows = num_splits * tiles_per_split * row_tile
    m1 = (mask.reshape(N) > 0).astype(jnp.bfloat16)
    m1 = jnp.pad(m1, ((0, m_rows * G - N),))
    mf = m1.reshape(m_rows, G)

    # (G, FL) selector: expands a per-row mask to per-lane with one tiny MXU matmul.
    sel = jnp.kron(jnp.eye(G, dtype=jnp.float32),
                   jnp.ones((1, F), jnp.float32)).astype(jnp.bfloat16)
    # (FL, FL) fold matrix: sums the G lane copies of each feature and re-tiles.
    fold = (jnp.kron(jnp.ones((G, G), jnp.float32), jnp.eye(F, dtype=jnp.float32))
            if G > 1 else None)
    w_t = jnp.tile(weight.astype(jnp.float32), G).reshape(1, FL)
    b_t = jnp.tile(bias.astype(jnp.float32), G).reshape(1, FL)

    # ------------------------------ kernels ----------------------------------

    def _expand_mask(m, sel_ref):
        # (rows, G) 0/1 bf16 -> (rows, FL) exact 0/1 f32 on the otherwise idle MXU.
        if G > 1:
            return jnp.dot(m, sel_ref[...], preferred_element_type=jnp.float32)
        return m.astype(jnp.float32)      # (rows, 1) broadcasts over FL

    def _stats_kernel(x_ref, m_ref, sel_ref, sum_ref, sq_ref, cnt_ref):
        @pl.when(pl.program_id(1) == 0)
        def _():
            sum_ref[...] = jnp.zeros_like(sum_ref)
            sq_ref[...] = jnp.zeros_like(sq_ref)
            cnt_ref[...] = jnp.zeros_like(cnt_ref)

        xv = x_ref[...].astype(jnp.float32)              # (TR, FL)
        m_exp = _expand_mask(m_ref[...], sel_ref)        # exact 0.0 / 1.0
        # where(), not multiply: undefined bytes over-read in a ragged tail tile
        # (mask there is a defined 0) can never poison the statistics.
        xm = jnp.where(m_exp > 0, xv, 0.0)
        sum_ref[...] += jnp.sum(xm, axis=0, keepdims=True)
        sq_ref[...] += jnp.sum(xm * xm, axis=0, keepdims=True)
        cnt_ref[...] += jnp.sum(m_ref[...].astype(jnp.float32)).reshape(1, 1)

    def _finalize_and_apply(x_ref, m_ref, sel_ref, sum_ref, sq_ref, cnt_ref,
                            w_ref, b_ref, o_ref, fold_ref=None):
        # Finalize batch statistics in-kernel (tiny; hidden under the block DMA)
        # instead of a string of µs-scale XLA glue ops between the two passes.
        s = jnp.sum(sum_ref[...], axis=0)                # (1, FL) f32
        q = jnp.sum(sq_ref[...], axis=0)                 # (1, FL) f32
        cnt = jnp.maximum(jnp.sum(cnt_ref[...]), 1.0)    # scalar f32
        if fold_ref is not None:
            s = jnp.dot(s, fold_ref[...], preferred_element_type=jnp.float32)
            q = jnp.dot(q, fold_ref[...], preferred_element_type=jnp.float32)
        inv_cnt = 1.0 / cnt
        mean = s * inv_cnt
        var = jnp.maximum(q * inv_cnt - mean * mean, 0.0)    # biased variance
        scale = jax.lax.rsqrt(var + eps) * w_ref[...]        # (1, FL)
        shift = b_ref[...] - mean * scale                    # (1, FL)

        xv = x_ref[...].astype(jnp.float32)                  # (TR, FL)
        m_exp = _expand_mask(m_ref[...], sel_ref)
        o_ref[...] = jnp.where(m_exp > 0, xv * scale + shift, xv).astype(o_ref.dtype)

    if G > 1:
        def _apply_kernel(x_ref, m_ref, sel_ref, sum_ref, sq_ref, cnt_ref,
                          w_ref, b_ref, fold_ref, o_ref):
            _finalize_and_apply(x_ref, m_ref, sel_ref, sum_ref, sq_ref, cnt_ref,
                                w_ref, b_ref, o_ref, fold_ref)
    else:
        def _apply_kernel(x_ref, m_ref, sel_ref, sum_ref, sq_ref, cnt_ref,
                          w_ref, b_ref, o_ref):
            _finalize_and_apply(x_ref, m_ref, sel_ref, sum_ref, sq_ref, cnt_ref,
                                w_ref, b_ref, o_ref)

    # ---- pass 1: masked per-feature statistics ------------------------------
    sums, sqs, cnt = pl.pallas_call(
        _stats_kernel,
        out_shape=(
            jax.ShapeDtypeStruct((num_splits, 1, FL), jnp.float32),
            jax.ShapeDtypeStruct((num_splits, 1, FL), jnp.float32),
            jax.ShapeDtypeStruct((num_splits, 1, 1), jnp.float32),
        ),
        grid_spec=pltpu.PrefetchScalarGridSpec(
            num_scalar_prefetch=0,
            grid=(num_splits, tiles_per_split),
            in_specs=[
                pl.BlockSpec((row_tile, FL),
                             lambda c, i: (c * tiles_per_split + i, 0)),
                pl.BlockSpec((row_tile, G),
                             lambda c, i: (c * tiles_per_split + i, 0)),
                pl.BlockSpec((G, FL), lambda c, i: (0, 0)),
            ],
            out_specs=[
                pl.BlockSpec((None, 1, FL), lambda c, i: (c, 0, 0)),
                pl.BlockSpec((None, 1, FL), lambda c, i: (c, 0, 0)),
                pl.BlockSpec((None, 1, 1), lambda c, i: (c, 0, 0)),
            ],
        ),
        compiler_params=pltpu.CompilerParams(
            # NOTE(v7x): if profiling shows only one active TensorCore, switch the
            # leading axis to pltpu.CORE_PARALLEL (or an explicit core_map).
            dimension_semantics=("parallel", "arbitrary"),
            vmem_limit_bytes=vmem_limit),
    )(xf, mf, sel)

    # ---- pass 2: normalize masked rows, pass through unmasked rows ----------
    def _pass2(use_buffered):
        if use_buffered and hasattr(pl, "Buffered"):
            try:
                x_spec = pl.BlockSpec((row_tile, FL), lambda i: (i, 0),
                                      pipeline_mode=pl.Buffered(3))
            except TypeError:
                x_spec = pl.BlockSpec((row_tile, FL), lambda i: (i, 0))
        else:
            x_spec = pl.BlockSpec((row_tile, FL), lambda i: (i, 0))
        in_specs = [
            x_spec,
            pl.BlockSpec((row_tile, G), lambda i: (i, 0)),
            pl.BlockSpec((G, FL), lambda i: (0, 0)),
            pl.BlockSpec((num_splits, 1, FL), lambda i: (0, 0, 0)),
            pl.BlockSpec((num_splits, 1, FL), lambda i: (0, 0, 0)),
            pl.BlockSpec((num_splits, 1, 1), lambda i: (0, 0, 0)),
            pl.BlockSpec((1, FL), lambda i: (0, 0)),
            pl.BlockSpec((1, FL), lambda i: (0, 0)),
        ]
        args = [xf, mf, sel, sums, sqs, cnt, w_t, b_t]
        if G > 1:
            in_specs.append(pl.BlockSpec((FL, FL), lambda i: (0, 0)))
            args.append(fold)
        return pl.pallas_call(
            _apply_kernel,
            out_shape=jax.ShapeDtypeStruct((R, FL), in_dtype),
            grid_spec=pltpu.PrefetchScalarGridSpec(
                num_scalar_prefetch=0,
                grid=(RT,),
                in_specs=in_specs,
                out_specs=pl.BlockSpec((row_tile, FL), lambda i: (i, 0)),
            ),
            compiler_params=pltpu.CompilerParams(
                dimension_semantics=("parallel",),
                vmem_limit_bytes=vmem_limit),
        )(*args)

    try:
        outf = _pass2(True)      # triple-buffer the wide x stream when supported
    except Exception:
        outf = _pass2(False)     # fall back to default double-buffering

    out = outf.reshape(Np, F)
    if pad_rows:
        out = out[:N]            # only when a (tiny) pad was actually added
    return out.reshape(B, T, F)


# ----------------------------- Pure-JAX reference -----------------------------

def _reference(x, mask, weight, bias, eps=1e-5):
    B, T, F = x.shape
    x2 = x.reshape(-1, F).astype(jnp.float32)
    m = (mask.reshape(-1, 1) > 0).astype(jnp.float32)
    cnt = jnp.maximum(jnp.sum(m), 1.0)
    mean = jnp.sum(x2 * m, axis=0, keepdims=True) / cnt
    var = jnp.sum((x2 * m) ** 2, axis=0, keepdims=True) / cnt - mean ** 2
    normed = (x2 - mean) * jax.lax.rsqrt(var + eps) * weight[None, :] + bias[None, :]
    out = jnp.where(m > 0, normed, x2)
    return out.reshape(B, T, F).astype(x.dtype)


# ------------------------------------ Main -------------------------------------

if __name__ == "__main__":
    # Primary example (matches the module's intended use): B=2, T=8, F=32.
    B, T, F = 2, 8, 32
    key = jax.random.PRNGKey(0)
    x = jax.random.normal(key, (B, T, F), dtype=jnp.float32)

    lengths = jnp.array([6, 3], dtype=jnp.int32)          # variable-length sequences
    mask = (jnp.arange(T)[None, :] < lengths[:, None]).astype(jnp.float32)  # (B, T)

    weight = 1.0 + 0.01 * jnp.arange(F, dtype=jnp.float32)
    bias = 0.02 * jnp.arange(F, dtype=jnp.float32)

    out = masked_batchnorm_train(x, mask, weight, bias)
    out = jax.block_until_ready(out)
    ref = _reference(x, mask, weight, bias)
    assert out.shape == (B, T, F)
    assert jnp.allclose(out, ref, atol=1e-3, rtol=1e-3), "mismatch vs reference"

    # Secondary check: ragged last tile + gcd lane folding (F=48 -> G=8) + bf16.
    B2, T2, F2 = 3, 67, 48
    k1, _ = jax.random.split(key)
    x2 = jax.random.normal(k1, (B2, T2, F2), dtype=jnp.bfloat16)
    len2 = jnp.array([50, 31, 62], dtype=jnp.int32)
    mask2 = (jnp.arange(T2)[None, :] < len2[:, None]).astype(jnp.float32)
    w2 = 1.0 + 0.01 * jnp.arange(F2, dtype=jnp.float32)
    b2 = 0.02 * jnp.arange(F2, dtype=jnp.float32)
    out2 = jax.block_until_ready(masked_batchnorm_train(x2, mask2, w2, b2, row_tile=16))
    ref2 = _reference(x2, mask2, w2, b2)
    assert out2.shape == (B2, T2, F2)
    assert jnp.allclose(out2.astype(jnp.float32), ref2.astype(jnp.float32),
                        atol=5e-2, rtol=5e-2), "mismatch vs reference (ragged/bf16)"

    print("KERNEL_OK")
</pallas_src>

<mosaic_0001>
module attributes {stable_mosaic.version = 11 : i64} {
  func.func @_stats_kernel(%arg0: i32, %arg1: i32, %arg2: memref<8x128xf32, #tpu.memory_space<vmem>>, %arg3: memref<8x4xbf16, #tpu.memory_space<vmem>>, %arg4: memref<4x128xbf16, #tpu.memory_space<vmem>>, %arg5: memref<1x1x128xf32, #tpu.memory_space<vmem>>, %arg6: memref<1x1x128xf32, #tpu.memory_space<vmem>>, %arg7: memref<1x1x1xf32, #tpu.memory_space<vmem>>) attributes {dimension_semantics = [#tpu.dimension_semantics<parallel>, #tpu.dimension_semantics<arbitrary>], iteration_bounds = array<i64: 1, 1>, scalar_prefetch = 0 : i64, scratch_operands = 0 : i64, tpu.core_type = #tpu.core_type<tc>, window_params = [{transform_indices = @transform_0, window_bounds = array<i64: 8, 128>}, {transform_indices = @transform_1, window_bounds = array<i64: 8, 4>}, {pipeline_mode = #tpu.pipeline_mode<synchronous>, transform_indices = @transform_2, window_bounds = array<i64: 4, 128>}, {transform_indices = @transform_3, window_bounds = array<i64: 1, 1, 128>}, {transform_indices = @transform_4, window_bounds = array<i64: 1, 1, 128>}, {transform_indices = @transform_5, window_bounds = array<i64: 1, 1, 1>}]} {
    %c0_i32 = arith.constant 0 : i32
    %0 = arith.cmpi eq, %arg1, %c0_i32 : i32
    %1 = arith.extui %0 : i1 to i32
    %c0_i32_0 = arith.constant 0 : i32
    %2 = arith.cmpi ne, %1, %c0_i32_0 : i32
    scf.if %2 {
      %cst_31 = arith.constant 0.000000e+00 : f32
      %41 = vector.broadcast %cst_31 : f32 to vector<1x128xf32>
      %c0_32 = arith.constant 0 : index
      %c0_33 = arith.constant 0 : index
      %c0_34 = arith.constant 0 : index
      %42 = vector.load %arg5[%c0_32, %c0_33, %c0_34] : memref<1x1x128xf32, #tpu.memory_space<vmem>>, vector<1x1x128xf32>
      %43 = vector.shape_cast %42 : vector<1x1x128xf32> to vector<1x128xf32>
      %44 = vector.shape_cast %41 : vector<1x128xf32> to vector<1x1x128xf32>
      tpu.vector_store %arg5[%c0_32, %c0_33, %c0_34], %44 {strides = array<i32>} : memref<1x1x128xf32, #tpu.memory_space<vmem>>, vector<1x1x128xf32>,
      %cst_35 = arith.constant 0.000000e+00 : f32
      %45 = vector.broadcast %cst_35 : f32 to vector<1x128xf32>
      %c0_36 = arith.constant 0 : index
      %c0_37 = arith.constant 0 : index
      %c0_38 = arith.constant 0 : index
      %46 = vector.load %arg6[%c0_36, %c0_37, %c0_38] : memref<1x1x128xf32, #tpu.memory_space<vmem>>, vector<1x1x128xf32>
      %47 = vector.shape_cast %46 : vector<1x1x128xf32> to vector<1x128xf32>
      %48 = vector.shape_cast %45 : vector<1x128xf32> to vector<1x1x128xf32>
      tpu.vector_store %arg6[%c0_36, %c0_37, %c0_38], %48 {strides = array<i32>} : memref<1x1x128xf32, #tpu.memory_space<vmem>>, vector<1x1x128xf32>,
      %cst_39 = arith.constant 0.000000e+00 : f32
      %49 = vector.broadcast %cst_39 : f32 to vector<1x1xf32>
      %c0_40 = arith.constant 0 : index
      %c0_41 = arith.constant 0 : index
      %c0_42 = arith.constant 0 : index
      %50 = vector.load %arg7[%c0_40, %c0_41, %c0_42] : memref<1x1x1xf32, #tpu.memory_space<vmem>>, vector<1x1x1xf32>
      %51 = vector.shape_cast %50 : vector<1x1x1xf32> to vector<1x1xf32>
      %52 = vector.shape_cast %49 : vector<1x1xf32> to vector<1x1x1xf32>
      tpu.vector_store %arg7[%c0_40, %c0_41, %c0_42], %52 {strides = array<i32>} : memref<1x1x1xf32, #tpu.memory_space<vmem>>, vector<1x1x1xf32>,
    } else {
    }
    %c0 = arith.constant 0 : index
    %c0_1 = arith.constant 0 : index
    %3 = vector.load %arg2[%c0, %c0_1] : memref<8x128xf32, #tpu.memory_space<vmem>>, vector<8x128xf32>
    %c0_2 = arith.constant 0 : index
    %c0_3 = arith.constant 0 : index
    %4 = vector.load %arg3[%c0_2, %c0_3] : memref<8x4xbf16, #tpu.memory_space<vmem>>, vector<8x4xbf16>
    %c0_4 = arith.constant 0 : index
    %c0_5 = arith.constant 0 : index
    %5 = vector.load %arg4[%c0_4, %c0_5] : memref<4x128xbf16, #tpu.memory_space<vmem>>, vector<4x128xbf16>
    %cst = arith.constant dense<0.000000e+00> : vector<8x128xf32>
    %6 = tpu.matmul %4, %5, %cst {dimension_numbers = #tpu.dot_dimension_numbers<[1], [0], [0], [1], [0, 0, 1, 1], [], []>} : vector<8x4xbf16>, vector<4x128xbf16>, vector<8x128xf32> -> vector<8x128xf32>
    %cst_6 = arith.constant 0.000000e+00 : f32
    %7 = vector.broadcast %cst_6 : f32 to vector<8x128xf32>
    %8 = arith.cmpf ogt, %6, %7 : vector<8x128xf32>
    %cst_7 = arith.constant 0.000000e+00 : f32
    %9 = vector.broadcast %cst_7 : f32 to vector<8x128xf32>
    %10 = arith.select %8, %3, %9 : vector<8x128xi1>, vector<8x128xf32>
    %c0_8 = arith.constant 0 : index
    %c0_9 = arith.constant 0 : index
    %c0_10 = arith.constant 0 : index
    %11 = vector.load %arg5[%c0_8, %c0_9, %c0_10] : memref<1x1x128xf32, #tpu.memory_space<vmem>>, vector<1x1x128xf32>
    %12 = vector.shape_cast %11 : vector<1x1x128xf32> to vector<1x128xf32>
    %cst_11 = arith.constant dense<0.000000e+00> : vector<128xf32>
    %13 = vector.multi_reduction <add>, %10, %cst_11 [0] : vector<8x128xf32> to vector<128xf32>
    %14 = vector.shape_cast %13 : vector<128xf32> to vector<1x128xf32>
    %15 = arith.addf %12, %14 : vector<1x128xf32>
    %c0_12 = arith.constant 0 : index
    %c0_13 = arith.constant 0 : index
    %c0_14 = arith.constant 0 : index
    %16 = vector.load %arg5[%c0_12, %c0_13, %c0_14] : memref<1x1x128xf32, #tpu.memory_space<vmem>>, vector<1x1x128xf32>
    %17 = vector.shape_cast %16 : vector<1x1x128xf32> to vector<1x128xf32>
    %18 = vector.shape_cast %15 : vector<1x128xf32> to vector<1x1x128xf32>
    tpu.vector_store %arg5[%c0_12, %c0_13, %c0_14], %18 {strides = array<i32>} : memref<1x1x128xf32, #tpu.memory_space<vmem>>, vector<1x1x128xf32>,
    %c0_15 = arith.constant 0 : index
    %c0_16 = arith.constant 0 : index
    %c0_17 = arith.constant 0 : index
    %19 = vector.load %arg6[%c0_15, %c0_16, %c0_17] : memref<1x1x128xf32, #tpu.memory_space<vmem>>, vector<1x1x128xf32>
    %20 = vector.shape_cast %19 : vector<1x1x128xf32> to vector<1x128xf32>
    %21 = arith.mulf %10, %10 : vector<8x128xf32>
    %cst_18 = arith.constant dense<0.000000e+00> : vector<128xf32>
    %22 = vector.multi_reduction <add>, %21, %cst_18 [0] : vector<8x128xf32> to vector<128xf32>
    %23 = vector.shape_cast %22 : vector<128xf32> to vector<1x128xf32>
    %24 = arith.addf %20, %23 : vector<1x128xf32>
    %c0_19 = arith.constant 0 : index
    %c0_20 = arith.constant 0 : index
    %c0_21 = arith.constant 0 : index
    %25 = vector.load %arg6[%c0_19, %c0_20, %c0_21] : memref<1x1x128xf32, #tpu.memory_space<vmem>>, vector<1x1x128xf32>
    %26 = vector.shape_cast %25 : vector<1x1x128xf32> to vector<1x128xf32>
    %27 = vector.shape_cast %24 : vector<1x128xf32> to vector<1x1x128xf32>
    tpu.vector_store %arg6[%c0_19, %c0_20, %c0_21], %27 {strides = array<i32>} : memref<1x1x128xf32, #tpu.memory_space<vmem>>, vector<1x1x128xf32>,
    %c0_22 = arith.constant 0 : index
    %c0_23 = arith.constant 0 : index
    %c0_24 = arith.constant 0 : index
    %28 = vector.load %arg7[%c0_22, %c0_23, %c0_24] : memref<1x1x1xf32, #tpu.memory_space<vmem>>, vector<1x1x1xf32>
    %29 = vector.shape_cast %28 : vector<1x1x1xf32> to vector<1x1xf32>
    %c0_25 = arith.constant 0 : index
    %c0_26 = arith.constant 0 : index
    %30 = vector.load %arg3[%c0_25, %c0_26] : memref<8x4xbf16, #tpu.memory_space<vmem>>, vector<8x4xbf16>
    %31 = arith.extf %30 : vector<8x4xbf16> to vector<8x4xf32>
    %32 = vector.shape_cast %31 : vector<8x4xf32> to vector<1x8x4xf32>
    %cst_27 = arith.constant dense<0.000000e+00> : vector<1xf32>
    %33 = vector.multi_reduction <add>, %32, %cst_27 [1, 2] : vector<1x8x4xf32> to vector<1xf32>
    %34 = vector.shape_cast %33 : vector<1xf32> to vector<1x1x1xf32>
    %35 = vector.extract %34[0, 0, 0] : f32 from vector<1x1x1xf32>
    %36 = vector.broadcast %35 : f32 to vector<1x1xf32>
    %37 = arith.addf %29, %36 : vector<1x1xf32>
    %c0_28 = arith.constant 0 : index
    %c0_29 = arith.constant 0 : index
    %c0_30 = arith.constant 0 : index
    %38 = vector.load %arg7[%c0_28, %c0_29, %c0_30] : memref<1x1x1xf32, #tpu.memory_space<vmem>>, vector<1x1x1xf32>
    %39 = vector.shape_cast %38 : vector<1x1x1xf32> to vector<1x1xf32>
    %40 = vector.shape_cast %37 : vector<1x1xf32> to vector<1x1x1xf32>
    tpu.vector_store %arg7[%c0_28, %c0_29, %c0_30], %40 {strides = array<i32>} : memref<1x1x1xf32, #tpu.memory_space<vmem>>, vector<1x1x1xf32>,
    return
  }
  func.func @transform_0(%arg0: i32, %arg1: i32) -> (i32, i32) {
    %c1_i32 = arith.constant 1 : i32
    %0 = arith.muli %arg0, %c1_i32 : i32
    %1 = arith.addi %0, %arg1 : i32
    %c0_i32 = arith.constant 0 : i32
    %c0_i32_0 = arith.constant 0 : i32
    return %1, %c0_i32 : i32, i32
  }
  func.func @transform_1(%arg0: i32, %arg1: i32) -> (i32, i32) {
    %c1_i32 = arith.constant 1 : i32
    %0 = arith.muli %arg0, %c1_i32 : i32
    %1 = arith.addi %0, %arg1 : i32
    %c0_i32 = arith.constant 0 : i32
    %c0_i32_0 = arith.constant 0 : i32
    return %1, %c0_i32 : i32, i32
  }
  func.func @transform_2(%arg0: i32, %arg1: i32) -> (i32, i32) {
    %c0_i32 = arith.constant 0 : i32
    %c0_i32_0 = arith.constant 0 : i32
    %c0_i32_1 = arith.constant 0 : i32
    return %c0_i32, %c0_i32_0 : i32, i32
  }
  func.func @transform_3(%arg0: i32, %arg1: i32) -> (i32, i32, i32) {
    %c0_i32 = arith.constant 0 : i32
    %c0_i32_0 = arith.constant 0 : i32
    %c0_i32_1 = arith.constant 0 : i32
    return %arg0, %c0_i32, %c0_i32_0 : i32, i32, i32
  }
  func.func @transform_4(%arg0: i32, %arg1: i32) -> (i32, i32, i32) {
    %c0_i32 = arith.constant 0 : i32
    %c0_i32_0 = arith.constant 0 : i32
    %c0_i32_1 = arith.constant 0 : i32
    return %arg0, %c0_i32, %c0_i32_0 : i32, i32, i32
  }
  func.func @transform_5(%arg0: i32, %arg1: i32) -> (i32, i32, i32) {
    %c0_i32 = arith.constant 0 : i32
    %c0_i32_0 = arith.constant 0 : i32
    %c0_i32_1 = arith.constant 0 : i32
    return %arg0, %c0_i32, %c0_i32_0 : i32, i32, i32
  }
}

</mosaic_0001>

<llo_original>
// kernel: tpu_custom_call.1
$region0: #{tpu_custom_call.1}
  #allocation0 [shape = 'u32[]', space=smem, size = 0x4, offset = 0x4, fixed_abs, tag = 'smem constant byte address 0x4 - core index']
  #allocation1 [shape = 'u32[144,128]{1,0:T(1,128)}', space=vmem, size = 0x12000, scoped, tag = 'internal scratch']
  %s0 = inlined_call_operand.hbm [shape: f32[8,128], index: 0, kind: input, shape index: {}]
  %s1 = inlined_call_operand.vmem [shape: bf16[8,4], index: 1, kind: input, shape index: {}]
  %s2 = inlined_call_operand.vmem [shape: bf16[4,128], index: 2, kind: input, shape index: {}]
  %s3 = inlined_call_operand.hbm [shape: f32[1,1,128], index: 3, kind: output, shape index: {0}]
  %s4 = inlined_call_operand.hbm [shape: f32[1,1,128], index: 4, kind: output, shape index: {1}]
  %s5 = inlined_call_operand.hbm [shape: f32[1,1,1], index: 5, kind: output, shape index: {2}]
  %6 = xla_tuple %s3, %s4, %s5
  %s7 = sld [smem:[#allocation0]]
  $region46: #{tpu_custom_call.1} parent=0
    _
  %s9 = ssub.s32 1, %s7
  %s10 = scalar_select 0, %s9, %s7
  $region1: #{tpu_custom_call.1} parent=0
    #allocation2 [shape = 'u8[4096]{0}', space=vmem, size = 0x1000, scoped, tag = 'input window, operand 0, single buffered']
    #allocation3 [shape = 's32[1]{0}', space=sflag, size = 0x4, scoped, tag = 'scoped memory for tpu_custom_call.1']
    #allocation4 [shape = 's32[1]{0}', space=sflag, size = 0x4, scoped, tag = 'scoped memory for tpu_custom_call.1']
    #allocation5 [shape = 'u8[512]{0}', space=vmem, size = 0x400, scoped, tag = 'output window, operand 0, single buffered']
    #allocation6 [shape = 'u8[512]{0}', space=vmem, size = 0x400, scoped, tag = 'output window, operand 1, single buffered']
    #allocation7 [shape = 's32[1]{0}', space=sflag, size = 0x4, scoped, tag = 'scoped memory for tpu_custom_call.1']
    #allocation8 [shape = 'u8[512]{0}', space=vmem, size = 0x400, scoped, tag = 'output window, operand 2, single buffered']
    %11 = vsyncpa [#allocation3], 0
    %12 = vsyncpa [#allocation4], 0
    %13 = vsyncpa [#allocation7], 0
    // Predicated region
    $region2: #{tpu_custom_call.1} parent=1 // pred_check
      _
    $region3: #{tpu_custom_call.1} parent=1 // pred_check_branch
      %15 = sbr.rel (0) target = $region5
    $region4: #{tpu_custom_call.1} parent=1 // pred_region
      %s16 = sadd.s32 0, 0
      %s18 = ssub.s32 128, 128
      %19 = vsyncadd [#allocation3], %s18
      %s20 = smul.addr %s16, 128
      %s21 = scalar_lea.hbm %s0, %s20
      %s23 = sshll.u32 [#allocation2], 4
      %s24 = int_to_ptr.vmem [resolvable:$true] %s23
      %26 = dma.hbm_to_vmem [thread:$0]  %s21, 128, %s24, [#allocation3]
    $region5: #{tpu_custom_call.1} parent=1 // pred_fallthru
      _
    // Predicated region
    $region6: #{tpu_custom_call.1} parent=1 // pred_check
      _
    $region7: #{tpu_custom_call.1} parent=1 // pred_check_branch
      %28 = sbr.rel (0) target = $region9
    $region8: #{tpu_custom_call.1} parent=1 // pred_region
      %s29 = sadd.s32 0, 0
      %p30 = scmp.lt.s32.totalorder %s29, 0
      %s31 = scalar_select %p30, %s29, 0
      %s32 = smul.addr %s31, 4
      %s33 = scalar_lea.vmem %s1, %s32
      %s34 = sadd.s32 0, 0
    $region9: #{tpu_custom_call.1} parent=1 // pred_fallthru
      _
    // Predicated region
    $region10: #{tpu_custom_call.1} parent=1 // pred_check
      _
    $region11: #{tpu_custom_call.1} parent=1 // pred_check_branch
      %36 = sbr.rel (0) target = $region13
    $region12: #{tpu_custom_call.1} parent=1 // pred_region
      _
    $region13: #{tpu_custom_call.1} parent=1 // pred_fallthru
      _
    // Predicated region
    $region14: #{tpu_custom_call.1} parent=1 // pred_check
      _
    $region15: #{tpu_custom_call.1} parent=1 // pred_check_branch
      %38 = sbr.rel (0) target = $region17
    $region16: #{tpu_custom_call.1} parent=1 // pred_region
      %39 = dma.done [#allocation3], 128
    $region17: #{tpu_custom_call.1} parent=1 // pred_fallthru
      _
    %s40 = sadd.s32 0, 0
    %p41 = scmp.lt.s32.totalorder %s40, 0
    %s42 = scalar_select %p41, %s40, 0
    %s43 = smul.addr %s42, 4
    %s44 = scalar_lea.vmem %s1, %s43
    %s45 = sadd.s32 0, 0
    %s46 = sadd.s32 0, 0
    %p47 = scmp.lt.s32.totalorder %s46, 0
    %s48 = scalar_select %p47, %s46, 0
    %s49 = smul.addr %s48, 4
    %s50 = scalar_lea.vmem %s1, %s49
    %s51 = sadd.s32 0, 0
    %p53 = scmp.eq.s32.totalorder 0, 0
    // Predicated region
    $region18: #{tpu_custom_call.1} parent=1 // pred_check
      %p54 = pneg %p53
    $region19: #{tpu_custom_call.1} parent=1 // pred_check_branch
      %56 = sbr.rel (%p54) target = $region21
    $region20: #{tpu_custom_call.1} parent=1 // pred_region
      %57 = vst [vmem:[#allocation5] sm:$0x1] 0.0
      %58 = vst [vmem:[#allocation6] sm:$0x1] 0.0
      %vm59 = vcmask 0
      %60 = vst.msk [vmem:[#allocation8] sm:$0x1] %vm59, 0.0
    $region21: #{tpu_custom_call.1} parent=1 // pred_fallthru
      _
    %v61 = vld [vmem:[#allocation2] sm:$0xff]
    %v62 = vld [vmem:[%s50] sm:$0xf]
    %v63 = vld [vmem:[%s2] sm:$0x3]
    %vm64 = vcmask 31744
    %v66 = vsel %vm64, %v62, 0
    %vm68 = vcmask 1041408
    %v70 = vsel %vm68, %v63, 0
    %72 = vmatprep.subr.bf16.mxu0 0
    %73 = vmatpush1.bf16.msra.mxu0 %v70
    %74 = vmatprep.subr.bf16.mxu0 0
    %75 = vmatpush1.bf16.msra.mxu0 0
    %76 = vmatprep.subr.bf16.mxu0 0
    %77 = vmatpush1.bf16.msra.mxu0 0
    %78 = vmatprep.subr.bf16.mxu0 0
    %79 = vmatpush1.bf16.msra.mxu0 0
    %80 = vmatprep.subr.bf16.mxu0 0
    %81 = vmatpush1.bf16.msra.mxu0 0
    %82 = vmatprep.subr.bf16.mxu0 0
    %83 = vmatpush1.bf16.msra.mxu0 0
    %84 = vmatprep.subr.bf16.mxu0 0
    %85 = vmatpush1.bf16.msra.mxu0 0
    %86 = vmatprep.subr.bf16.mxu0 0
    %87 = vmatpush1.bf16.msra.mxu0 0
    %88 = vmatprep.subr.bf16.mxu0 0
    %89 = vmatpush1.bf16.msra.mxu0 0
    %90 = vmatprep.subr.bf16.mxu0 0
    %91 = vmatpush1.bf16.msra.mxu0 0
    %92 = vmatprep.subr.bf16.mxu0 0
    %93 = vmatpush1.bf16.msra.mxu0 0
    %94 = vmatprep.subr.bf16.mxu0 0
    %95 = vmatpush1.bf16.msra.mxu0 0
    %96 = vmatprep.subr.bf16.mxu0 0
    %97 = vmatpush1.bf16.msra.mxu0 0
    %98 = vmatprep.subr.bf16.mxu0 0
    %99 = vmatpush1.bf16.msra.mxu0 0
    %100 = vmatprep.subr.bf16.mxu0 0
    %101 = vmatpush1.bf16.msra.mxu0 0
    %102 = vmatprep.subr.bf16.mxu0 0
    %103 = vmatpush1.bf16.msra.mxu0 0
    %104 = vmatprep.mubr.bf16.mxu0 0
    %105 = vmatmul.mubr.bf16.gmra.mrb[0].mxu0 %v66
    %v106 = vpop.f32.mrb[0].mxu0
    %v107 = vadd.f32 0.0, %v106
    %v108 = vpop.f32.mrb[0].mxu0
    %v109 = vpop.f32.mrb[0].mxu0
    %v110 = vpop.f32.mrb[0].mxu0
    %111 = vdwg.mxu0
    %vm112 = vcmp.gt.f32.partialorder %v107, 0.0
    %v113 = vsel %vm112, %v61, 0.0
    %v114 = vld [vmem:[#allocation5] sm:$0x1]
    %v115 = vrot.slane %v113, 4
    %v116 = vadd.f32 %v113, %v115
    %v117 = vrot.slane %v116, 2
    %v118 = vadd.f32 %v116, %v117
    %v119 = vrot.slane %v118, 1
    %v120 = vadd.f32 %v118, %v119
    %v121 = vadd.f32 %v114, %v120
    %122 = vst [vmem:[#allocation5] sm:$0x1] %v121
    %v123 = vld [vmem:[#allocation6] sm:$0x1]
    %v124 = vmul.f32 %v113, %v113
    %v125 = vrot.slane %v124, 4
    %v126 = vadd.f32 %v124, %v125
    %v127 = vrot.slane %v126, 2
    %v128 = vadd.f32 %v126, %v127
    %v129 = vrot.slane %v128, 1
    %v130 = vadd.f32 %v128, %v129
    %v131 = vadd.f32 %v123, %v130
    %132 = vst [vmem:[#allocation6] sm:$0x1] %v131
    %v133 = vld [vmem:[#allocation8] sm:$0x1]
    %v134 = vld [vmem:[%s50] sm:$0xf]
    %v135 = vunpack.c.l.bf16 %v134
    %v136 = vsel %vm64, %v135, 0.0
    %137 = vadd.xlane.f32.xlu0 %v136
    %v138 = vpop.xlane.xlu0 %137
    %v139 = vrot.slane %v138, 4
    %v140 = vadd.f32 %v138, %v139
    %v141 = vrot.slane %v140, 2
    %v142 = vadd.f32 %v140, %v141
    %v143 = vrot.slane %v142, 1
    %v144 = vadd.f32 %v142, %v143
    %s145 = vtos %v144
    %v146 = vstv %s145
    %v147 = vadd.f32 %v133, %v146
    %vm148 = vcmask 0
    %149 = vst.msk [vmem:[#allocation8] sm:$0x1] %vm148, %v147
    // Predicated region
    $region22: #{tpu_custom_call.1} parent=1 // pred_check
      _
    $region23: #{tpu_custom_call.1} parent=1 // pred_check_branch
      %151 = sbr.rel (0) target = $region25
    $region24: #{tpu_custom_call.1} parent=1 // pred_region
      %s153 = ssub.s32 16, 16
      %154 = vsyncadd [#allocation4], %s153
      %s156 = sshll.u32 [#allocation5], 4
      %s157 = int_to_ptr.vmem [resolvable:$true] %s156
      %159 = dma.vmem_to_hbm [thread:$0]  %s157, 16, %s3, [#allocation4]
    $region25: #{tpu_custom_call.1} parent=1 // pred_fallthru
      _
    // Predicated region
    $region26: #{tpu_custom_call.1} parent=1 // pred_check
      _
    $region27: #{tpu_custom_call.1} parent=1 // pred_check_branch
      %161 = sbr.rel (0) target = $region29
    $region28: #{tpu_custom_call.1} parent=1 // pred_region
      %s163 = ssub.s32 16, 16
      %164 = vsyncadd [#allocation7], %s163
      %s166 = sshll.u32 [#allocation6], 4
      %s167 = int_to_ptr.vmem [resolvable:$true] %s166
      %169 = dma.vmem_to_hbm [thread:$0]  %s167, 16, %s4, [#allocation7]
    $region29: #{tpu_custom_call.1} parent=1 // pred_fallthru
      _
    // Predicated region
    $region30: #{tpu_custom_call.1} parent=1 // pred_check
      _
    $region31: #{tpu_custom_call.1} parent=1 // pred_check_branch
      %171 = sbr.rel (0) target = $region33
    $region32: #{tpu_custom_call.1} parent=1 // pred_region
      %s173 = ssub.s32 16, 16
      %174 = vsyncadd [#allocation7], %s173
      %s176 = sshll.u32 [#allocation8], 4
      %s177 = int_to_ptr.vmem [resolvable:$true] %s176
      %179 = dma.vmem_to_hbm [thread:$0]  %s177, 16, %s5, [#allocation7]
    $region33: #{tpu_custom_call.1} parent=1 // pred_fallthru
      _
    // Predicated region
    $region34: #{tpu_custom_call.1} parent=1 // pred_check
      _
    $region35: #{tpu_custom_call.1} parent=1 // pred_check_branch
      %181 = sbr.rel (0) target = $region37
    $region36: #{tpu_custom_call.1} parent=1 // pred_region
      %182 = dma.done [#allocation4], 16
    $region37: #{tpu_custom_call.1} parent=1 // pred_fallthru
      _
    // Predicated region
    $region38: #{tpu_custom_call.1} parent=1 // pred_check
      _
    $region39: #{tpu_custom_call.1} parent=1 // pred_check_branch
      %184 = sbr.rel (0) target = $region41
    $region40: #{tpu_custom_call.1} parent=1 // pred_region
      %185 = dma.done [#allocation7], 16
    $region41: #{tpu_custom_call.1} parent=1 // pred_fallthru
      _
    // Predicated region
    $region42: #{tpu_custom_call.1} parent=1 // pred_check
      _
    $region43: #{tpu_custom_call.1} parent=1 // pred_check_branch
      %187 = sbr.rel (0) target = $region45
    $region44: #{tpu_custom_call.1} parent=1 // pred_region
      %188 = dma.done [#allocation7], 16
    $region45: #{tpu_custom_call.1} parent=1 // pred_fallthru
      _
    %189 = vsyncpa [#allocation3], 1
    %190 = vsyncpa [#allocation4], 1
    %191 = vsyncpa [#allocation7], 1

</llo_original>
